<compile_context>
chip_gen: v7x
topology: tpu7x:2x2x1
jax: 0.10.0
libtpu: 0.0.40
codegen_flags: <defaults>
</compile_context>

<pallas_src>
import functools

import jax
import jax.numpy as jnp
from jax.experimental import pallas as pl
from jax.experimental.pallas import tpu as pltpu

LANE = 128


def _round_up(x, m):
    return ((x + m - 1) // m) * m


def actor_kernel(x_ref, w1_ref, b1_ref, w2_ref, b2_ref, w3_ref, b3_ref, o_ref):
    # Layer 1: (TB, Din) @ (Din, H) -> f32 acc, bias + relu in f32.
    h1 = jnp.dot(x_ref[...], w1_ref[...], preferred_element_type=jnp.float32)
    h1 = jnp.maximum(h1 + b1_ref[...], 0.0)

    # Layer 2: (TB, H) @ (H, H). Recast activations to bf16 for the MXU.
    h2 = jnp.dot(h1.astype(jnp.bfloat16), w2_ref[...],
                 preferred_element_type=jnp.float32)
    h2 = jnp.maximum(h2 + b2_ref[...], 0.0)

    # Layer 3: (TB, H) @ (H, A) -> tanh (EUP) in f32, lane-dense store.
    h3 = jnp.dot(h2.astype(jnp.bfloat16), w3_ref[...],
                 preferred_element_type=jnp.float32)
    o_ref[...] = jnp.tanh(h3 + b3_ref[...]).astype(o_ref.dtype)


def init_actor_params(key, num_inputs, hidden_size, num_outputs):
    """Deterministic init mimicking nn.Linear default (uniform +/-1/sqrt(fan_in)).
    Weights stored transposed: (in_features, out_features). Biases: (1, out)."""
    keys = jax.random.split(key, 6)

    def linear(kw, kb, fan_in, fan_out):
        bound = 1.0 / jnp.sqrt(jnp.float32(fan_in))
        w = jax.random.uniform(kw, (fan_in, fan_out), jnp.float32, -bound, bound)
        b = jax.random.uniform(kb, (1, fan_out), jnp.float32, -bound, bound)
        return w, b

    w1, b1 = linear(keys[0], keys[1], num_inputs, hidden_size)
    w2, b2 = linear(keys[2], keys[3], hidden_size, hidden_size)
    w3, b3 = linear(keys[4], keys[5], hidden_size, num_outputs)
    return {"w1": w1, "b1": b1, "w2": w2, "b2": b2, "w3": w3, "b3": b3}


def prepare_actor_params(params):
    """Zero-pad every dim to a multiple of 128 and cast matmul weights to bf16.

    Padding columns/rows are zero and padded biases are zero, so padded hidden
    units stay at relu(0)=0 and contribute nothing downstream; padded output
    columns are sliced off in the wrapper.
    Returns (padded_params_dict, dims) with dims static Python ints.
    """
    w1, b1 = params["w1"], params["b1"]
    w2, b2 = params["w2"], params["b2"]
    w3, b3 = params["w3"], params["b3"]

    d_in, hidden = w1.shape
    num_out = w3.shape[1]
    d_pad = _round_up(d_in, LANE)
    h_pad = _round_up(hidden, LANE)
    a_pad = _round_up(num_out, LANE)

    def pad2(a, rows, cols):
        return jnp.pad(a, ((0, rows - a.shape[0]), (0, cols - a.shape[1])))

    padded = {
        "w1": pad2(w1, d_pad, h_pad).astype(jnp.bfloat16),
        "b1": pad2(b1, 1, h_pad).astype(jnp.float32),
        "w2": pad2(w2, h_pad, h_pad).astype(jnp.bfloat16),
        "b2": pad2(b2, 1, h_pad).astype(jnp.float32),
        "w3": pad2(w3, h_pad, a_pad).astype(jnp.bfloat16),
        "b3": pad2(b3, 1, a_pad).astype(jnp.float32),
    }
    dims = (d_in, hidden, num_out, d_pad, h_pad, a_pad)
    return padded, dims


@functools.partial(jax.jit, static_argnames=("dims", "block_batch"))
def actor_forward(x, pp, dims, block_batch=256):
    """x: (B, num_inputs) float32. pp: padded params. dims: static shape info."""
    d_in, hidden, num_out, d_pad, h_pad, a_pad = dims
    B = x.shape[0]
    tb = block_batch
    b_pad = _round_up(max(B, tb), tb)

    # Lane-dense, zero-padded, bf16 input slab.
    x_pad = jnp.zeros((b_pad, d_pad), jnp.bfloat16)
    x_pad = x_pad.at[:B, :d_in].set(x.astype(jnp.bfloat16))

    grid = (b_pad // tb,)

    flops = 2 * b_pad * (d_pad * h_pad + h_pad * h_pad + h_pad * a_pad)
    bytes_accessed = (
        b_pad * d_pad * 2                                     # x (bf16)
        + (d_pad * h_pad + h_pad * h_pad + h_pad * a_pad) * 2  # weights (bf16)
        + (2 * h_pad + a_pad) * 4                              # biases (f32)
        + b_pad * a_pad * 4                                    # output (f32)
    )
    cost = pl.CostEstimate(flops=flops,
                           transcendentals=b_pad * a_pad,
                           bytes_accessed=bytes_accessed)

    # Weights/biases: same block for every grid step -> VMEM-resident.
    resident = lambda shape: pl.BlockSpec(shape, lambda i: (0, 0))

    out_pad = pl.pallas_call(
        actor_kernel,
        out_shape=jax.ShapeDtypeStruct((b_pad, a_pad), jnp.float32),
        grid=grid,
        in_specs=[
            pl.BlockSpec((tb, d_pad), lambda i: (i, 0)),   # x tile per grid step
            resident((d_pad, h_pad)), resident((1, h_pad)),
            resident((h_pad, h_pad)), resident((1, h_pad)),
            resident((h_pad, a_pad)), resident((1, a_pad)),
        ],
        out_specs=pl.BlockSpec((tb, a_pad), lambda i: (i, 0)),
        compiler_params=pltpu.CompilerParams(
            dimension_semantics=("parallel",)),
        cost_estimate=cost,
    )(x_pad, pp["w1"], pp["b1"], pp["w2"], pp["b2"], pp["w3"], pp["b3"])

    # Slice away batch and action padding outside the kernel (lane-dense store
    # inside, real dims outside).
    return out_pad[:B, :num_out]


if __name__ == "__main__":
    key = jax.random.PRNGKey(0)
    k_param, k_x1, k_x2 = jax.random.split(key, 3)

    num_inputs = 17     # HalfCheetah observation dim
    hidden_size = 64
    num_outputs = 6     # HalfCheetah action dim

    params = init_actor_params(k_param, num_inputs, hidden_size, num_outputs)
    pp, dims = prepare_actor_params(params)

    def reference(x):
        # Same math as the PyTorch forward, with the kernel's bf16 matmul inputs
        # and f32 accumulation/epilogue.
        bf = jnp.bfloat16
        h = jnp.maximum(
            jnp.dot(x.astype(bf), params["w1"].astype(bf),
                    preferred_element_type=jnp.float32) + params["b1"], 0.0)
        h = jnp.maximum(
            jnp.dot(h.astype(bf), params["w2"].astype(bf),
                    preferred_element_type=jnp.float32) + params["b2"], 0.0)
        return jnp.tanh(
            jnp.dot(h.astype(bf), params["w3"].astype(bf),
                    preferred_element_type=jnp.float32) + params["b3"])

    # Small batch (single grid step) and a batch that spans two grid steps.
    for kx, batch in ((k_x1, 8), (k_x2, 300)):
        x = jax.random.normal(kx, (batch, num_inputs), jnp.float32)
        out = jax.block_until_ready(actor_forward(x, pp, dims))
        ref = reference(x)
        assert out.shape == (batch, num_outputs)
        assert jnp.allclose(out, ref, atol=1e-2, rtol=1e-2), (
            "max abs err = %f" % float(jnp.max(jnp.abs(out - ref))))

    print("KERNEL_OK")
</pallas_src>

<mosaic_0001>
module attributes {stable_mosaic.version = 11 : i64} {
  func.func @actor_kernel(%arg0: i32, %arg1: memref<256x128xbf16, #tpu.memory_space<vmem>>, %arg2: memref<128x128xbf16, #tpu.memory_space<vmem>>, %arg3: memref<1x128xf32, #tpu.memory_space<vmem>>, %arg4: memref<128x128xbf16, #tpu.memory_space<vmem>>, %arg5: memref<1x128xf32, #tpu.memory_space<vmem>>, %arg6: memref<128x128xbf16, #tpu.memory_space<vmem>>, %arg7: memref<1x128xf32, #tpu.memory_space<vmem>>, %arg8: memref<256x128xf32, #tpu.memory_space<vmem>>) attributes {dimension_semantics = [#tpu.dimension_semantics<parallel>], iteration_bounds = array<i64: 1>, scalar_prefetch = 0 : i64, scratch_operands = 0 : i64, tpu.core_type = #tpu.core_type<tc>, window_params = [{transform_indices = @transform_0, window_bounds = array<i64: 256, 128>}, {pipeline_mode = #tpu.pipeline_mode<synchronous>, transform_indices = @transform_1, window_bounds = array<i64: 128, 128>}, {pipeline_mode = #tpu.pipeline_mode<synchronous>, transform_indices = @transform_2, window_bounds = array<i64: 1, 128>}, {pipeline_mode = #tpu.pipeline_mode<synchronous>, transform_indices = @transform_3, window_bounds = array<i64: 128, 128>}, {pipeline_mode = #tpu.pipeline_mode<synchronous>, transform_indices = @transform_4, window_bounds = array<i64: 1, 128>}, {pipeline_mode = #tpu.pipeline_mode<synchronous>, transform_indices = @transform_5, window_bounds = array<i64: 128, 128>}, {pipeline_mode = #tpu.pipeline_mode<synchronous>, transform_indices = @transform_6, window_bounds = array<i64: 1, 128>}, {transform_indices = @transform_7, window_bounds = array<i64: 256, 128>}]} {
    %c0 = arith.constant 0 : index
    %c0_0 = arith.constant 0 : index
    %0 = vector.load %arg1[%c0, %c0_0] : memref<256x128xbf16, #tpu.memory_space<vmem>>, vector<256x128xbf16>
    %c0_1 = arith.constant 0 : index
    %c0_2 = arith.constant 0 : index
    %1 = vector.load %arg2[%c0_1, %c0_2] : memref<128x128xbf16, #tpu.memory_space<vmem>>, vector<128x128xbf16>
    %cst = arith.constant dense<0.000000e+00> : vector<256x128xf32>
    %2 = tpu.matmul %0, %1, %cst {dimension_numbers = #tpu.dot_dimension_numbers<[1], [0], [0], [1], [0, 0, 1, 1], [], []>} : vector<256x128xbf16>, vector<128x128xbf16>, vector<256x128xf32> -> vector<256x128xf32>
    %c0_3 = arith.constant 0 : index
    %c0_4 = arith.constant 0 : index
    %3 = vector.load %arg3[%c0_3, %c0_4] : memref<1x128xf32, #tpu.memory_space<vmem>>, vector<1x128xf32>
    %4 = vector.broadcast %3 : vector<1x128xf32> to vector<256x128xf32>
    %5 = arith.addf %2, %4 : vector<256x128xf32>
    %cst_5 = arith.constant 0.000000e+00 : f32
    %6 = vector.broadcast %cst_5 : f32 to vector<256x128xf32>
    %7 = arith.maximumf %5, %6 : vector<256x128xf32>
    %8 = arith.truncf %7 : vector<256x128xf32> to vector<256x128xbf16>
    %c0_6 = arith.constant 0 : index
    %c0_7 = arith.constant 0 : index
    %9 = vector.load %arg4[%c0_6, %c0_7] : memref<128x128xbf16, #tpu.memory_space<vmem>>, vector<128x128xbf16>
    %cst_8 = arith.constant dense<0.000000e+00> : vector<256x128xf32>
    %10 = tpu.matmul %8, %9, %cst_8 {dimension_numbers = #tpu.dot_dimension_numbers<[1], [0], [0], [1], [0, 0, 1, 1], [], []>} : vector<256x128xbf16>, vector<128x128xbf16>, vector<256x128xf32> -> vector<256x128xf32>
    %c0_9 = arith.constant 0 : index
    %c0_10 = arith.constant 0 : index
    %11 = vector.load %arg5[%c0_9, %c0_10] : memref<1x128xf32, #tpu.memory_space<vmem>>, vector<1x128xf32>
    %12 = vector.broadcast %11 : vector<1x128xf32> to vector<256x128xf32>
    %13 = arith.addf %10, %12 : vector<256x128xf32>
    %cst_11 = arith.constant 0.000000e+00 : f32
    %14 = vector.broadcast %cst_11 : f32 to vector<256x128xf32>
    %15 = arith.maximumf %13, %14 : vector<256x128xf32>
    %16 = arith.truncf %15 : vector<256x128xf32> to vector<256x128xbf16>
    %c0_12 = arith.constant 0 : index
    %c0_13 = arith.constant 0 : index
    %17 = vector.load %arg6[%c0_12, %c0_13] : memref<128x128xbf16, #tpu.memory_space<vmem>>, vector<128x128xbf16>
    %cst_14 = arith.constant dense<0.000000e+00> : vector<256x128xf32>
    %18 = tpu.matmul %16, %17, %cst_14 {dimension_numbers = #tpu.dot_dimension_numbers<[1], [0], [0], [1], [0, 0, 1, 1], [], []>} : vector<256x128xbf16>, vector<128x128xbf16>, vector<256x128xf32> -> vector<256x128xf32>
    %c0_15 = arith.constant 0 : index
    %c0_16 = arith.constant 0 : index
    %19 = vector.load %arg7[%c0_15, %c0_16] : memref<1x128xf32, #tpu.memory_space<vmem>>, vector<1x128xf32>
    %20 = vector.broadcast %19 : vector<1x128xf32> to vector<256x128xf32>
    %21 = arith.addf %18, %20 : vector<256x128xf32>
    %22 = math.tanh %21 : vector<256x128xf32>
    %c0_17 = arith.constant 0 : index
    %c0_18 = arith.constant 0 : index
    %23 = vector.load %arg8[%c0_17, %c0_18] : memref<256x128xf32, #tpu.memory_space<vmem>>, vector<256x128xf32>
    tpu.vector_store %arg8[%c0_17, %c0_18], %22 {strides = array<i32>} : memref<256x128xf32, #tpu.memory_space<vmem>>, vector<256x128xf32>,
    return
  }
  func.func @transform_0(%arg0: i32) -> (i32, i32) {
    %c0_i32 = arith.constant 0 : i32
    %c0_i32_0 = arith.constant 0 : i32
    return %arg0, %c0_i32 : i32, i32
  }
  func.func @transform_1(%arg0: i32) -> (i32, i32) {
    %c0_i32 = arith.constant 0 : i32
    %c0_i32_0 = arith.constant 0 : i32
    %c0_i32_1 = arith.constant 0 : i32
    return %c0_i32, %c0_i32_0 : i32, i32
  }
  func.func @transform_2(%arg0: i32) -> (i32, i32) {
    %c0_i32 = arith.constant 0 : i32
    %c0_i32_0 = arith.constant 0 : i32
    %c0_i32_1 = arith.constant 0 : i32
    return %c0_i32, %c0_i32_0 : i32, i32
  }
  func.func @transform_3(%arg0: i32) -> (i32, i32) {
    %c0_i32 = arith.constant 0 : i32
    %c0_i32_0 = arith.constant 0 : i32
    %c0_i32_1 = arith.constant 0 : i32
    return %c0_i32, %c0_i32_0 : i32, i32
  }
  func.func @transform_4(%arg0: i32) -> (i32, i32) {
    %c0_i32 = arith.constant 0 : i32
    %c0_i32_0 = arith.constant 0 : i32
    %c0_i32_1 = arith.constant 0 : i32
    return %c0_i32, %c0_i32_0 : i32, i32
  }
  func.func @transform_5(%arg0: i32) -> (i32, i32) {
    %c0_i32 = arith.constant 0 : i32
    %c0_i32_0 = arith.constant 0 : i32
    %c0_i32_1 = arith.constant 0 : i32
    return %c0_i32, %c0_i32_0 : i32, i32
  }
  func.func @transform_6(%arg0: i32) -> (i32, i32) {
    %c0_i32 = arith.constant 0 : i32
    %c0_i32_0 = arith.constant 0 : i32
    %c0_i32_1 = arith.constant 0 : i32
    return %c0_i32, %c0_i32_0 : i32, i32
  }
  func.func @transform_7(%arg0: i32) -> (i32, i32) {
    %c0_i32 = arith.constant 0 : i32
    %c0_i32_0 = arith.constant 0 : i32
    return %arg0, %c0_i32 : i32, i32
  }
}

</mosaic_0001>

<llo_original>
// kernel: actor_forward.1
$region0: #{actor_forward.1}
  #allocation0 [shape = 'u32[]', space=smem, size = 0x4, offset = 0x4, fixed_abs, tag = 'smem constant byte address 0x4 - core index']
  #allocation1 [shape = 'u32[144,128]{1,0:T(1,128)}', space=vmem, size = 0x12000, scoped, tag = 'internal scratch']
  %s0 = inlined_call_operand.vmem [shape: bf16[256,128], index: 0, kind: input, shape index: {}]
  %s1 = inlined_call_operand.vmem [shape: bf16[128,128], index: 1, kind: input, shape index: {}]
  %s2 = inlined_call_operand.vmem [shape: f32[1,128], index: 2, kind: input, shape index: {}]
  %s3 = inlined_call_operand.vmem [shape: bf16[128,128], index: 3, kind: input, shape index: {}]
  %s4 = inlined_call_operand.vmem [shape: f32[1,128], index: 4, kind: input, shape index: {}]
  %s5 = inlined_call_operand.hbm [shape: bf16[128,128], index: 5, kind: input, shape index: {}]
  %s6 = inlined_call_operand.vmem [shape: f32[1,128], index: 6, kind: input, shape index: {}]
  %s7 = inlined_call_operand.vmem [shape: f32[256,128], index: 7, kind: output, shape index: {}]
  %s8 = sld [smem:[#allocation0]]
  $region42: #{actor_forward.1} parent=0
    _
  %s10 = ssub.s32 1, %s8
  %s11 = scalar_select 0, %s10, %s8
  $region1: #{actor_forward.1} parent=0
    #allocation2 [shape = 'u8[32768]{0}', space=vmem, size = 0x8000, scoped, tag = 'input window, operand 5, single buffered']
    #allocation3 [shape = 's32[1]{0}', space=sflag, size = 0x4, scoped, tag = 'scoped memory for actor_forward.1']
    %12 = vsyncpa [#allocation3], 0
    // Predicated region
    $region2: #{actor_forward.1} parent=1 // pred_check
      _
    $region3: #{actor_forward.1} parent=1 // pred_check_branch
      %14 = sbr.rel (0) target = $region5
    $region4: #{actor_forward.1} parent=1 // pred_region
      _
    $region5: #{actor_forward.1} parent=1 // pred_fallthru
      _
    // Predicated region
    $region6: #{actor_forward.1} parent=1 // pred_check
      _
    $region7: #{actor_forward.1} parent=1 // pred_check_branch
      %16 = sbr.rel (0) target = $region9
    $region8: #{actor_forward.1} parent=1 // pred_region
      _
    $region9: #{actor_forward.1} parent=1 // pred_fallthru
      _
    // Predicated region
    $region10: #{actor_forward.1} parent=1 // pred_check
      _
    $region11: #{actor_forward.1} parent=1 // pred_check_branch
      %18 = sbr.rel (0) target = $region13
    $region12: #{actor_forward.1} parent=1 // pred_region
      _
    $region13: #{actor_forward.1} parent=1 // pred_fallthru
      _
    // Predicated region
    $region14: #{actor_forward.1} parent=1 // pred_check
      _
    $region15: #{actor_forward.1} parent=1 // pred_check_branch
      %20 = sbr.rel (0) target = $region17
    $region16: #{actor_forward.1} parent=1 // pred_region
      _
    $region17: #{actor_forward.1} parent=1 // pred_fallthru
      _
    // Predicated region
    $region18: #{actor_forward.1} parent=1 // pred_check
      _
    $region19: #{actor_forward.1} parent=1 // pred_check_branch
      %22 = sbr.rel (0) target = $region21
    $region20: #{actor_forward.1} parent=1 // pred_region
      _
    $region21: #{actor_forward.1} parent=1 // pred_fallthru
      _
    // Predicated region
    $region22: #{actor_forward.1} parent=1 // pred_check
      _
    $region23: #{actor_forward.1} parent=1 // pred_check_branch
      %24 = sbr.rel (0) target = $region25
    $region24: #{actor_forward.1} parent=1 // pred_region
      %s26 = ssub.s32 1024, 1024
      %27 = vsyncadd [#allocation3], %s26
      %s28 = sshll.u32 [#allocation2], 4
      %s29 = int_to_ptr.vmem [resolvable:$true] %s28
      %34 = dma.hbm_to_vmem [thread:$0]  %s5, 1024, %s29, [#allocation3], 64, 64, 4
    $region25: #{actor_forward.1} parent=1 // pred_fallthru
      _
    // Predicated region
    $region26: #{actor_forward.1} parent=1 // pred_check
      _
    $region27: #{actor_forward.1} parent=1 // pred_check_branch
      %36 = sbr.rel (0) target = $region29
    $region28: #{actor_forward.1} parent=1 // pred_region
      _
    $region29: #{actor_forward.1} parent=1 // pred_fallthru
      _
    // Predicated region
    $region30: #{actor_forward.1} parent=1 // pred_check
      _
    $region31: #{actor_forward.1} parent=1 // pred_check_branch
      %38 = sbr.rel (0) target = $region33
    $region32: #{actor_forward.1} parent=1 // pred_region
      %39 = dma.done [#allocation3], 1024
    $region33: #{actor_forward.1} parent=1 // pred_fallthru
      _
    %v41 = vld [vmem:[%s0] sm:$0xf]
    %v42 = vld [vmem:[%s0 + $0x4] sm:$0xf]
    %v43 = vld [vmem:[%s0 + $0x8] sm:$0xf]
    %v44 = vld [vmem:[%s0 + $0xc] sm:$0xf]
    %v45 = vld [vmem:[%s0 + $0x10] sm:$0xf]
    %v46 = vld [vmem:[%s0 + $0x14] sm:$0xf]
    %v47 = vld [vmem:[%s0 + $0x18] sm:$0xf]
    %v48 = vld [vmem:[%s0 + $0x1c] sm:$0xf]
    %v49 = vld [vmem:[%s0 + $0x20] sm:$0xf]
    %v50 = vld [vmem:[%s0 + $0x24] sm:$0xf]
    %v51 = vld [vmem:[%s0 + $0x28] sm:$0xf]
    %v52 = vld [vmem:[%s0 + $0x2c] sm:$0xf]
    %v53 = vld [vmem:[%s0 + $0x30] sm:$0xf]
    %v54 = vld [vmem:[%s0 + $0x34] sm:$0xf]
    %v55 = vld [vmem:[%s0 + $0x38] sm:$0xf]
    %v56 = vld [vmem:[%s0 + $0x3c] sm:$0xf]
    %v57 = vld [vmem:[%s0 + $0x40] sm:$0xf]
    %v58 = vld [vmem:[%s0 + $0x44] sm:$0xf]
    %v59 = vld [vmem:[%s0 + $0x48] sm:$0xf]
    %v60 = vld [vmem:[%s0 + $0x4c] sm:$0xf]
    %v61 = vld [vmem:[%s0 + $0x50] sm:$0xf]
    %v62 = vld [vmem:[%s0 + $0x54] sm:$0xf]
    %v63 = vld [vmem:[%s0 + $0x58] sm:$0xf]
    %v64 = vld [vmem:[%s0 + $0x5c] sm:$0xf]
    %v65 = vld [vmem:[%s0 + $0x60] sm:$0xf]
    %v66 = vld [vmem:[%s0 + $0x64] sm:$0xf]
    %v67 = vld [vmem:[%s0 + $0x68] sm:$0xf]
    %v68 = vld [vmem:[%s0 + $0x6c] sm:$0xf]
    %v69 = vld [vmem:[%s0 + $0x70] sm:$0xf]
    %v70 = vld [vmem:[%s0 + $0x74] sm:$0xf]
    %v71 = vld [vmem:[%s0 + $0x78] sm:$0xf]
    %v72 = vld [vmem:[%s0 + $0x7c] sm:$0xf]
    %v73 = vld [vmem:[%s1] sm:$0xf]
    %v74 = vld [vmem:[%s1 + $0x4] sm:$0xf]
    %v75 = vld [vmem:[%s1 + $0x8] sm:$0xf]
    %v76 = vld [vmem:[%s1 + $0xc] sm:$0xf]
    %v77 = vld [vmem:[%s1 + $0x10] sm:$0xf]
    %v78 = vld [vmem:[%s1 + $0x14] sm:$0xf]
    %v79 = vld [vmem:[%s1 + $0x18] sm:$0xf]
    %v80 = vld [vmem:[%s1 + $0x1c] sm:$0xf]
    %v81 = vld [vmem:[%s1 + $0x20] sm:$0xf]
    %v82 = vld [vmem:[%s1 + $0x24] sm:$0xf]
    %v83 = vld [vmem:[%s1 + $0x28] sm:$0xf]
    %v84 = vld [vmem:[%s1 + $0x2c] sm:$0xf]
    %v85 = vld [vmem:[%s1 + $0x30] sm:$0xf]
    %v86 = vld [vmem:[%s1 + $0x34] sm:$0xf]
    %v87 = vld [vmem:[%s1 + $0x38] sm:$0xf]
    %v88 = vld [vmem:[%s1 + $0x3c] sm:$0xf]
    %v89 = vld [vmem:[%s2] sm:$0x1]
    %v91 = vlaneseq
    %v92 = vshrl.u32 %v91, 7
    %v93 = vsub.s32 0, %v92
    %v94 = vrot.slane %v89, %v93
    %v128 = vunpack.c.l.b16 %v41
    %v129 = vunpack.c.l.b16 %v42
    %v130 = vunpack.c.l.b16 %v43
    %v131 = vunpack.c.l.b16 %v44
    %v132 = vunpack.c.l.b16 %v45
    %v133 = vunpack.c.l.b16 %v46
    %v134 = vunpack.c.l.b16 %v47
    %v135 = vunpack.c.l.b16 %v48
    %v136 = vunpack.c.l.b16 %v49
    %v137 = vunpack.c.l.b16 %v50
    %v138 = vunpack.c.l.b16 %v51
    %v139 = vunpack.c.l.b16 %v52
    %v140 = vunpack.c.l.b16 %v53
    %v141 = vunpack.c.l.b16 %v54
    %v142 = vunpack.c.l.b16 %v55
    %v143 = vunpack.c.l.b16 %v56
    %v144 = vunpack.c.l.b16 %v57
    %v145 = vunpack.c.l.b16 %v58
    %v146 = vunpack.c.l.b16 %v59
    %v147 = vunpack.c.l.b16 %v60
    %v148 = vunpack.c.l.b16 %v61
    %v149 = vunpack.c.l.b16 %v62
    %v150 = vunpack.c.l.b16 %v63
    %v151 = vunpack.c.l.b16 %v64
    %v152 = vunpack.c.l.b16 %v65
    %v153 = vunpack.c.l.b16 %v66
    %v154 = vunpack.c.l.b16 %v67
    %v155 = vunpack.c.l.b16 %v68
    %v156 = vunpack.c.l.b16 %v69
    %v157 = vunpack.c.l.b16 %v70
    %v158 = vunpack.c.l.b16 %v71
    %v159 = vunpack.c.l.b16 %v72
    %v160 = vpack.c.b16 %v129, %v128
    %v161 = vpack.c.b16 %v131, %v130
    %v162 = vpack.c.b16 %v133, %v132
    %v163 = vpack.c.b16 %v135, %v134
    %v164 = vpack.c.b16 %v137, %v136
    %v165 = vpack.c.b16 %v139, %v138
    %v166 = vpack.c.b16 %v141, %v140
    %v167 = vpack.c.b16 %v143, %v142
    %v168 = vpack.c.b16 %v145, %v144
    %v169 = vpack.c.b16 %v147, %v146
    %v170 = vpack.c.b16 %v149, %v148
    %v171 = vpack.c.b16 %v151, %v150
    %v172 = vpack.c.b16 %v153, %v152
    %v173 = vpack.c.b16 %v155, %v154
    %v174 = vpack.c.b16 %v157, %v156
    %v175 = vpack.c.b16 %v159, %v158
    %v208 = vunpack.c.l.b16 %v73
    %v209 = vunpack.c.l.b16 %v74
    %v210 = vunpack.c.l.b16 %v75
    %v211 = vunpack.c.l.b16 %v76
    %v212 = vunpack.c.l.b16 %v77
    %v213 = vunpack.c.l.b16 %v78
    %v214 = vunpack.c.l.b16 %v79
    %v215 = vunpack.c.l.b16 %v80
    %v216 = vunpack.c.l.b16 %v81
    %v217 = vunpack.c.l.b16 %v82
    %v218 = vunpack.c.l.b16 %v83
    %v219 = vunpack.c.l.b16 %v84
    %v220 = vunpack.c.l.b16 %v85
    %v221 = vunpack.c.l.b16 %v86
    %v222 = vunpack.c.l.b16 %v87
    %v223 = vunpack.c.l.b16 %v88
    %v224 = vpack.c.b16 %v209, %v208
    %v225 = vpack.c.b16 %v211, %v210
    %v226 = vpack.c.b16 %v213, %v212
    %v227 = vpack.c.b16 %v215, %v214
    %v228 = vpack.c.b16 %v217, %v216
    %v229 = vpack.c.b16 %v219, %v218
    %v230 = vpack.c.b16 %v221, %v220
    %v231 = vpack.c.b16 %v223, %v222
    %240 = vmatprep.subr.bf16.mxu0 0
    %241 = vmatpush1.bf16.msra.mxu0 %v224
    %242 = vmatprep.subr.bf16.mxu0 0
    %243 = vmatpush1.bf16.msra.mxu0 %v225
    %244 = vmatprep.subr.bf16.mxu0 0
    %245 = vmatpush1.bf16.msra.mxu0 %v226
    %246 = vmatprep.subr.bf16.mxu0 0
    %247 = vmatpush1.bf16.msra.mxu0 %v227
    %248 = vmatprep.subr.bf16.mxu0 0
    %249 = vmatpush1.bf16.msra.mxu0 %v228
    %250 = vmatprep.subr.bf16.mxu0 0
    %251 = vmatpush1.bf16.msra.mxu0 %v229
    %252 = vmatprep.subr.bf16.mxu0 0
    %253 = vmatpush1.bf16.msra.mxu0 %v230
    %254 = vmatprep.subr.bf16.mxu0 0
    %255 = vmatpush1.bf16.msra.mxu0 %v231
    %256 = vmatprep.subr.bf16.mxu0 0
    %257 = vmatpush1.bf16.msra.mxu0 0
    %258 = vmatprep.subr.bf16.mxu0 0
    %259 = vmatpush1.bf16.msra.mxu0 0
    %260 = vmatprep.subr.bf16.mxu0 0
    %261 = vmatpush1.bf16.msra.mxu0 0
    %262 = vmatprep.subr.bf16.mxu0 0
    %263 = vmatpush1.bf16.msra.mxu0 0
    %264 = vmatprep.subr.bf16.mxu0 0
    %265 = vmatpush1.bf16.msra.mxu0 0
    %266 = vmatprep.subr.bf16.mxu0 0
    %267 = vmatpush1.bf16.msra.mxu0 0
    %268 = vmatprep.subr.bf16.mxu0 0
    %269 = vmatpush1.bf16.msra.mxu0 0
    %270 = vmatprep.subr.bf16.mxu0 0
    %271 = vmatpush1.bf16.msra.mxu0 0
    %272 = vmatprep.mubr.bf16.mxu0 0
    %273 = vmatmul.mubr.bf16.gmra.mrb[0].mxu0 %v160
    %v274 = vpop.f32.mrb[0].mxu0
    %v275 = vadd.f32 %v94, %v274
    %v276 = vpop.f32.mrb[0].mxu0
    %v277 = vpop.f32.mrb[0].mxu0
    %v278 = vadd.f32 %v94, %v277
    %v279 = vpop.f32.mrb[0].mxu0
    %280 = vmatprep.mubr.bf16.mxu0 0
    %281 = vmatmul.mubr.bf16.gmra.mrb[0].mxu0 %v161
    %v282 = vpop.f32.mrb[0].mxu0
    %v283 = vadd.f32 %v94, %v282
    %v284 = vpop.f32.mrb[0].mxu0
    %v285 = vpop.f32.mrb[0].mxu0
    %v286 = vadd.f32 %v94, %v285
    %v287 = vpop.f32.mrb[0].mxu0
    %288 = vmatprep.mubr.bf16.mxu0 0
    %289 = vmatmul.mubr.bf16.gmra.mrb[0].mxu0 %v162
    %v290 = vpop.f32.mrb[0].mxu0
    %v291 = vadd.f32 %v94, %v290
    %v292 = vpop.f32.mrb[0].mxu0
    %v293 = vpop.f32.mrb[0].mxu0
    %v294 = vadd.f32 %v94, %v293
    %v295 = vpop.f32.mrb[0].mxu0
    %296 = vmatprep.mubr.bf16.mxu0 0
    %297 = vmatmul.mubr.bf16.gmra.mrb[0].mxu0 %v163
    %v298 = vpop.f32.mrb[0].mxu0
    %v299 = vadd.f32 %v94, %v298
    %v300 = vpop.f32.mrb[0].mxu0
    %v301 = vpop.f32.mrb[0].mxu0
    %v302 = vadd.f32 %v94, %v301
    %v303 = vpop.f32.mrb[0].mxu0
    %304 = vmatprep.mubr.bf16.mxu0 0
    %305 = vmatmul.mubr.bf16.gmra.mrb[0].mxu0 %v164
    %v306 = vpop.f32.mrb[0].mxu0
    %v307 = vadd.f32 %v94, %v306
    %v308 = vpop.f32.mrb[0].mxu0
    %v309 = vpop.f32.mrb[0].mxu0
    %v310 = vadd.f32 %v94, %v309
    %v311 = vpop.f32.mrb[0].mxu0
    %312 = vmatprep.mubr.bf16.mxu0 0
    %313 = vmatmul.mubr.bf16.gmra.mrb[0].mxu0 %v165
    %v314 = vpop.f32.mrb[0].mxu0
    %v315 = vadd.f32 %v94, %v314
    %v316 = vpop.f32.mrb[0].mxu0
    %v317 = vpop.f32.mrb[0].mxu0
    %v318 = vadd.f32 %v94, %v317
    %v319 = vpop.f32.mrb[0].mxu0
    %320 = vmatprep.mubr.bf16.mxu0 0
    %321 = vmatmul.mubr.bf16.gmra.mrb[0].mxu0 %v166
    %v322 = vpop.f32.mrb[0].mxu0
    %v323 = vadd.f32 %v94, %v322
    %v324 = vpop.f32.mrb[0].mxu0
    %v325 = vpop.f32.mrb[0].mxu0
    %v326 = vadd.f32 %v94, %v325
    %v327 = vpop.f32.mrb[0].mxu0
    %328 = vmatprep.mubr.bf16.mxu0 0
    %329 = vmatmul.mubr.bf16.gmra.mrb[0].mxu0 %v167
    %v330 = vpop.f32.mrb[0].mxu0
    %v331 = vadd.f32 %v94, %v330
    %v332 = vpop.f32.mrb[0].mxu0
    %v333 = vpop.f32.mrb[0].mxu0
    %v334 = vadd.f32 %v94, %v333
    %v335 = vpop.f32.mrb[0].mxu0
    %336 = vmatprep.mubr.bf16.mxu0 0
    %337 = vmatmul.mubr.bf16.gmra.mrb[0].mxu0 %v168
    %v338 = vpop.f32.mrb[0].mxu0
    %v339 = vadd.f32 %v94, %v338
    %v340 = vpop.f32.mrb[0].mxu0
    %v341 = vpop.f32.mrb[0].mxu0
    %v342 = vadd.f32 %v94, %v341
    %v343 = vpop.f32.mrb[0].mxu0
    %344 = vmatprep.mubr.bf16.mxu0 0
    %345 = vmatmul.mubr.bf16.gmra.mrb[0].mxu0 %v169
    %v346 = vpop.f32.mrb[0].mxu0
    %v347 = vadd.f32 %v94, %v346
    %v348 = vpop.f32.mrb[0].mxu0
    %v349 = vpop.f32.mrb[0].mxu0
    %v350 = vadd.f32 %v94, %v349
    %v351 = vpop.f32.mrb[0].mxu0
    %352 = vmatprep.mubr.bf16.mxu0 0
    %353 = vmatmul.mubr.bf16.gmra.mrb[0].mxu0 %v170
    %v354 = vpop.f32.mrb[0].mxu0
    %v355 = vadd.f32 %v94, %v354
    %v356 = vpop.f32.mrb[0].mxu0
    %v357 = vpop.f32.mrb[0].mxu0
    %v358 = vadd.f32 %v94, %v357
    %v359 = vpop.f32.mrb[0].mxu0
    %360 = vmatprep.mubr.bf16.mxu0 0
    %361 = vmatmul.mubr.bf16.gmra.mrb[0].mxu0 %v171
    %v362 = vpop.f32.mrb[0].mxu0
    %v363 = vadd.f32 %v94, %v362
    %v364 = vpop.f32.mrb[0].mxu0
    %v365 = vpop.f32.mrb[0].mxu0
    %v366 = vadd.f32 %v94, %v365
    %v367 = vpop.f32.mrb[0].mxu0
    %368 = vmatprep.mubr.bf16.mxu0 0
    %369 = vmatmul.mubr.bf16.gmra.mrb[0].mxu0 %v172
    %v370 = vpop.f32.mrb[0].mxu0
    %v371 = vadd.f32 %v94, %v370
    %v372 = vpop.f32.mrb[0].mxu0
    %v373 = vpop.f32.mrb[0].mxu0
    %v374 = vadd.f32 %v94, %v373
    %v375 = vpop.f32.mrb[0].mxu0
    %376 = vmatprep.mubr.bf16.mxu0 0
    %377 = vmatmul.mubr.bf16.gmra.mrb[0].mxu0 %v173
    %v378 = vpop.f32.mrb[0].mxu0
    %v379 = vadd.f32 %v94, %v378
    %v380 = vpop.f32.mrb[0].mxu0
    %v381 = vpop.f32.mrb[0].mxu0
    %v382 = vadd.f32 %v94, %v381
    %v383 = vpop.f32.mrb[0].mxu0
    %384 = vmatprep.mubr.bf16.mxu0 0
    %385 = vmatmul.mubr.bf16.gmra.mrb[0].mxu0 %v174
    %v386 = vpop.f32.mrb[0].mxu0
    %v387 = vadd.f32 %v94, %v386
    %v388 = vpop.f32.mrb[0].mxu0
    %v389 = vpop.f32.mrb[0].mxu0
    %v390 = vadd.f32 %v94, %v389
    %v391 = vpop.f32.mrb[0].mxu0
    %392 = vmatprep.mubr.bf16.mxu0 0
    %393 = vmatmul.mubr.bf16.gmra.mrb[0].mxu0 %v175
    %v394 = vpop.f32.mrb[0].mxu0
    %v395 = vadd.f32 %v94, %v394
    %v396 = vpop.f32.mrb[0].mxu0
    %v397 = vpop.f32.mrb[0].mxu0
    %v398 = vadd.f32 %v94, %v397
    %v399 = vpop.f32.mrb[0].mxu0
    %400 = vdwg.mxu0
    %v401 = vmax.f32 %v275, 0.0
    %v402 = vmax.f32 %v278, 0.0
    %v403 = vmax.f32 %v283, 0.0
    %v404 = vmax.f32 %v286, 0.0
    %v405 = vmax.f32 %v291, 0.0
    %v406 = vmax.f32 %v294, 0.0
    %v407 = vmax.f32 %v299, 0.0
    %v408 = vmax.f32 %v302, 0.0
    %v409 = vmax.f32 %v307, 0.0
    %v410 = vmax.f32 %v310, 0.0
    %v411 = vmax.f32 %v315, 0.0
    %v412 = vmax.f32 %v318, 0.0
    %v413 = vmax.f32 %v323, 0.0
    %v414 = vmax.f32 %v326, 0.0
    %v415 = vmax.f32 %v331, 0.0
    %v416 = vmax.f32 %v334, 0.0
    %v417 = vmax.f32 %v339, 0.0
    %v418 = vmax.f32 %v342, 0.0
    %v419 = vmax.f32 %v347, 0.0
    %v420 = vmax.f32 %v350, 0.0
    %v421 = vmax.f32 %v355, 0.0
    %v422 = vmax.f32 %v358, 0.0
    %v423 = vmax.f32 %v363, 0.0
    %v424 = vmax.f32 %v366, 0.0
    %v425 = vmax.f32 %v371, 0.0
    %v426 = vmax.f32 %v374, 0.0
    %v427 = vmax.f32 %v379, 0.0
    %v428 = vmax.f32 %v382, 0.0
    %v429 = vmax.f32 %v387, 0.0
    %v430 = vmax.f32 %v390, 0.0
    %v431 = vmax.f32 %v395, 0.0
    %v432 = vmax.f32 %v398, 0.0
    %v433 = vpack.c.bf16 %v402, %v401
    %v434 = vpack.c.bf16 %v404, %v403
    %v435 = vpack.c.bf16 %v406, %v405
    %v436 = vpack.c.bf16 %v408, %v407
    %v437 = vpack.c.bf16 %v410, %v409
    %v438 = vpack.c.bf16 %v412, %v411
    %v439 = vpack.c.bf16 %v414, %v413
    %v440 = vpack.c.bf16 %v416, %v415
    %v441 = vpack.c.bf16 %v418, %v417
    %v442 = vpack.c.bf16 %v420, %v419
    %v443 = vpack.c.bf16 %v422, %v421
    %v444 = vpack.c.bf16 %v424, %v423
    %v445 = vpack.c.bf16 %v426, %v425
    %v446 = vpack.c.bf16 %v428, %v427
    %v447 = vpack.c.bf16 %v430, %v429
    %v448 = vpack.c.bf16 %v432, %v431
    %v449 = vld [vmem:[%s3] sm:$0xf]
    %v450 = vld [vmem:[%s3 + $0x4] sm:$0xf]
    %v451 = vld [vmem:[%s3 + $0x8] sm:$0xf]
    %v452 = vld [vmem:[%s3 + $0xc] sm:$0xf]
    %v453 = vld [vmem:[%s3 + $0x10] sm:$0xf]
    %v454 = vld [vmem:[%s3 + $0x14] sm:$0xf]
    %v455 = vld [vmem:[%s3 + $0x18] sm:$0xf]
    %v456 = vld [vmem:[%s3 + $0x1c] sm:$0xf]
    %v457 = vld [vmem:[%s3 + $0x20] sm:$0xf]
    %v458 = vld [vmem:[%s3 + $0x24] sm:$0xf]
    %v459 = vld [vmem:[%s3 + $0x28] sm:$0xf]
    %v460 = vld [vmem:[%s3 + $0x2c] sm:$0xf]
    %v461 = vld [vmem:[%s3 + $0x30] sm:$0xf]
    %v462 = vld [vmem:[%s3 + $0x34] sm:$0xf]
    %v463 = vld [vmem:[%s3 + $0x38] sm:$0xf]
    %v464 = vld [vmem:[%s3 + $0x3c] sm:$0xf]
    %v465 = vld [vmem:[%s4] sm:$0x1]
    %v467 = vlaneseq
    %v468 = vshrl.u32 %v467, 7
    %v469 = vsub.s32 0, %v468
    %v470 = vrot.slane %v465, %v469
    %v488 = vunpack.c.l.b16 %v449
    %v489 = vunpack.c.l.b16 %v450
    %v490 = vunpack.c.l.b16 %v451
    %v491 = vunpack.c.l.b16 %v452
    %v492 = vunpack.c.l.b16 %v453
    %v493 = vunpack.c.l.b16 %v454
    %v494 = vunpack.c.l.b16 %v455
    %v495 = vunpack.c.l.b16 %v456
    %v496 = vunpack.c.l.b16 %v457
    %v497 = vunpack.c.l.b16 %v458
    %v498 = vunpack.c.l.b16 %v459
    %v499 = vunpack.c.l.b16 %v460
    %v500 = vunpack.c.l.b16 %v461
    %v501 = vunpack.c.l.b16 %v462
    %v502 = vunpack.c.l.b16 %v463
    %v503 = vunpack.c.l.b16 %v464
    %v504 = vpack.c.b16 %v489, %v488
    %v505 = vpack.c.b16 %v491, %v490
    %v506 = vpack.c.b16 %v493, %v492
    %v507 = vpack.c.b16 %v495, %v494
    %v508 = vpack.c.b16 %v497, %v496
    %v509 = vpack.c.b16 %v499, %v498
    %v510 = vpack.c.b16 %v501, %v500
    %v511 = vpack.c.b16 %v503, %v502
    %520 = vmatprep.subr.bf16.mxu0 0
    %521 = vmatpush1.bf16.msra.mxu0 %v504
    %522 = vmatprep.subr.bf16.mxu0 0
    %523 = vmatpush1.bf16.msra.mxu0 %v505
    %524 = vmatprep.subr.bf16.mxu0 0
    %525 = vmatpush1.bf16.msra.mxu0 %v506
    %526 = vmatprep.subr.bf16.mxu0 0
    %527 = vmatpush1.bf16.msra.mxu0 %v507
    %528 = vmatprep.subr.bf16.mxu0 0
    %529 = vmatpush1.bf16.msra.mxu0 %v508
    %530 = vmatprep.subr.bf16.mxu0 0
    %531 = vmatpush1.bf16.msra.mxu0 %v509
    %532 = vmatprep.subr.bf16.mxu0 0
    %533 = vmatpush1.bf16.msra.mxu0 %v510
    %534 = vmatprep.subr.bf16.mxu0 0
    %535 = vmatpush1.bf16.msra.mxu0 %v511
    %536 = vmatprep.subr.bf16.mxu0 0
    %537 = vmatpush1.bf16.msra.mxu0 0
    %538 = vmatprep.subr.bf16.mxu0 0
    %539 = vmatpush1.bf16.msra.mxu0 0
    %540 = vmatprep.subr.bf16.mxu0 0
    %541 = vmatpush1.bf16.msra.mxu0 0
    %542 = vmatprep.subr.bf16.mxu0 0
    %543 = vmatpush1.bf16.msra.mxu0 0
    %544 = vmatprep.subr.bf16.mxu0 0
    %545 = vmatpush1.bf16.msra.mxu0 0
    %546 = vmatprep.subr.bf16.mxu0 0
    %547 = vmatpush1.bf16.msra.mxu0 0
    %548 = vmatprep.subr.bf16.mxu0 0
    %549 = vmatpush1.bf16.msra.mxu0 0
    %550 = vmatprep.subr.bf16.mxu0 0
    %551 = vmatpush1.bf16.msra.mxu0 0
    %552 = vmatprep.mubr.bf16.mxu0 0
    %553 = vmatmul.mubr.bf16.gmra.mrb[0].mxu0 %v433
    %v554 = vpop.f32.mrb[0].mxu0
    %v555 = vadd.f32 %v470, %v554
    %v556 = vpop.f32.mrb[0].mxu0
    %v557 = vpop.f32.mrb[0].mxu0
    %v558 = vadd.f32 %v470, %v557
    %v559 = vpop.f32.mrb[0].mxu0
    %560 = vmatprep.mubr.bf16.mxu0 0
    %561 = vmatmul.mubr.bf16.gmra.mrb[0].mxu0 %v434
    %v562 = vpop.f32.mrb[0].mxu0
    %v563 = vadd.f32 %v470, %v562
    %v564 = vpop.f32.mrb[0].mxu0
    %v565 = vpop.f32.mrb[0].mxu0
    %v566 = vadd.f32 %v470, %v565
    %v567 = vpop.f32.mrb[0].mxu0
    %568 = vmatprep.mubr.bf16.mxu0 0
    %569 = vmatmul.mubr.bf16.gmra.mrb[0].mxu0 %v435
    %v570 = vpop.f32.mrb[0].mxu0
    %v571 = vadd.f32 %v470, %v570
    %v572 = vpop.f32.mrb[0].mxu0
    %v573 = vpop.f32.mrb[0].mxu0
    %v574 = vadd.f32 %v470, %v573
    %v575 = vpop.f32.mrb[0].mxu0
    %576 = vmatprep.mubr.bf16.mxu0 0
    %577 = vmatmul.mubr.bf16.gmra.mrb[0].mxu0 %v436
    %v578 = vpop.f32.mrb[0].mxu0
    %v579 = vadd.f32 %v470, %v578
    %v580 = vpop.f32.mrb[0].mxu0
    %v581 = vpop.f32.mrb[0].mxu0
    %v582 = vadd.f32 %v470, %v581
    %v583 = vpop.f32.mrb[0].mxu0
    %584 = vmatprep.mubr.bf16.mxu0 0
    %585 = vmatmul.mubr.bf16.gmra.mrb[0].mxu0 %v437
    %v586 = vpop.f32.mrb[0].mxu0
    %v587 = vadd.f32 %v470, %v586
    %v588 = vpop.f32.mrb[0].mxu0
    %v589 = vpop.f32.mrb[0].mxu0
    %v590 = vadd.f32 %v470, %v589
    %v591 = vpop.f32.mrb[0].mxu0
    %592 = vmatprep.mubr.bf16.mxu0 0
    %593 = vmatmul.mubr.bf16.gmra.mrb[0].mxu0 %v438
    %v594 = vpop.f32.mrb[0].mxu0
    %v595 = vadd.f32 %v470, %v594
    %v596 = vpop.f32.mrb[0].mxu0
    %v597 = vpop.f32.mrb[0].mxu0
    %v598 = vadd.f32 %v470, %v597
    %v599 = vpop.f32.mrb[0].mxu0
    %600 = vmatprep.mubr.bf16.mxu0 0
    %601 = vmatmul.mubr.bf16.gmra.mrb[0].mxu0 %v439
    %v602 = vpop.f32.mrb[0].mxu0
    %v603 = vadd.f32 %v470, %v602
    %v604 = vpop.f32.mrb[0].mxu0
    %v605 = vpop.f32.mrb[0].mxu0
    %v606 = vadd.f32 %v470, %v605
    %v607 = vpop.f32.mrb[0].mxu0
    %608 = vmatprep.mubr.bf16.mxu0 0
    %609 = vmatmul.mubr.bf16.gmra.mrb[0].mxu0 %v440
    %v610 = vpop.f32.mrb[0].mxu0
    %v611 = vadd.f32 %v470, %v610
    %v612 = vpop.f32.mrb[0].mxu0
    %v613 = vpop.f32.mrb[0].mxu0
    %v614 = vadd.f32 %v470, %v613
    %v615 = vpop.f32.mrb[0].mxu0
    %616 = vmatprep.mubr.bf16.mxu0 0
    %617 = vmatmul.mubr.bf16.gmra.mrb[0].mxu0 %v441
    %v618 = vpop.f32.mrb[0].mxu0
    %v619 = vadd.f32 %v470, %v618
    %v620 = vpop.f32.mrb[0].mxu0
    %v621 = vpop.f32.mrb[0].mxu0
    %v622 = vadd.f32 %v470, %v621
    %v623 = vpop.f32.mrb[0].mxu0
    %624 = vmatprep.mubr.bf16.mxu0 0
    %625 = vmatmul.mubr.bf16.gmra.mrb[0].mxu0 %v442
    %v626 = vpop.f32.mrb[0].mxu0
    %v627 = vadd.f32 %v470, %v626
    %v628 = vpop.f32.mrb[0].mxu0
    %v629 = vpop.f32.mrb[0].mxu0
    %v630 = vadd.f32 %v470, %v629
    %v631 = vpop.f32.mrb[0].mxu0
    %632 = vmatprep.mubr.bf16.mxu0 0
    %633 = vmatmul.mubr.bf16.gmra.mrb[0].mxu0 %v443
    %v634 = vpop.f32.mrb[0].mxu0
    %v635 = vadd.f32 %v470, %v634
    %v636 = vpop.f32.mrb[0].mxu0
    %v637 = vpop.f32.mrb[0].mxu0
    %v638 = vadd.f32 %v470, %v637
    %v639 = vpop.f32.mrb[0].mxu0
    %640 = vmatprep.mubr.bf16.mxu0 0
    %641 = vmatmul.mubr.bf16.gmra.mrb[0].mxu0 %v444
    %v642 = vpop.f32.mrb[0].mxu0
    %v643 = vadd.f32 %v470, %v642
    %v644 = vpop.f32.mrb[0].mxu0
    %v645 = vpop.f32.mrb[0].mxu0
    %v646 = vadd.f32 %v470, %v645
    %v647 = vpop.f32.mrb[0].mxu0
    %648 = vmatprep.mubr.bf16.mxu0 0
    %649 = vmatmul.mubr.bf16.gmra.mrb[0].mxu0 %v445
    %v650 = vpop.f32.mrb[0].mxu0
    %v651 = vadd.f32 %v470, %v650
    %v652 = vpop.f32.mrb[0].mxu0
    %v653 = vpop.f32.mrb[0].mxu0
    %v654 = vadd.f32 %v470, %v653
    %v655 = vpop.f32.mrb[0].mxu0
    %656 = vmatprep.mubr.bf16.mxu0 0
    %657 = vmatmul.mubr.bf16.gmra.mrb[0].mxu0 %v446
    %v658 = vpop.f32.mrb[0].mxu0
    %v659 = vadd.f32 %v470, %v658
    %v660 = vpop.f32.mrb[0].mxu0
    %v661 = vpop.f32.mrb[0].mxu0
    %v662 = vadd.f32 %v470, %v661
    %v663 = vpop.f32.mrb[0].mxu0
    %664 = vmatprep.mubr.bf16.mxu0 0
    %665 = vmatmul.mubr.bf16.gmra.mrb[0].mxu0 %v447
    %v666 = vpop.f32.mrb[0].mxu0
    %v667 = vadd.f32 %v470, %v666
    %v668 = vpop.f32.mrb[0].mxu0
    %v669 = vpop.f32.mrb[0].mxu0
    %v670 = vadd.f32 %v470, %v669
    %v671 = vpop.f32.mrb[0].mxu0
    %672 = vmatprep.mubr.bf16.mxu0 0
    %673 = vmatmul.mubr.bf16.gmra.mrb[0].mxu0 %v448
    %v674 = vpop.f32.mrb[0].mxu0
    %v675 = vadd.f32 %v470, %v674
    %v676 = vpop.f32.mrb[0].mxu0
    %v677 = vpop.f32.mrb[0].mxu0
    %v678 = vadd.f32 %v470, %v677
    %v679 = vpop.f32.mrb[0].mxu0
    %680 = vdwg.mxu0
    %v681 = vmax.f32 %v555, 0.0
    %v682 = vmax.f32 %v558, 0.0
    %v683 = vmax.f32 %v563, 0.0
    %v684 = vmax.f32 %v566, 0.0
    %v685 = vmax.f32 %v571, 0.0
    %v686 = vmax.f32 %v574, 0.0
    %v687 = vmax.f32 %v579, 0.0
    %v688 = vmax.f32 %v582, 0.0
    %v689 = vmax.f32 %v587, 0.0
    %v690 = vmax.f32 %v590, 0.0
    %v691 = vmax.f32 %v595, 0.0
    %v692 = vmax.f32 %v598, 0.0
    %v693 = vmax.f32 %v603, 0.0
    %v694 = vmax.f32 %v606, 0.0
    %v695 = vmax.f32 %v611, 0.0
    %v696 = vmax.f32 %v614, 0.0
    %v697 = vmax.f32 %v619, 0.0
    %v698 = vmax.f32 %v622, 0.0
    %v699 = vmax.f32 %v627, 0.0
    %v700 = vmax.f32 %v630, 0.0
    %v701 = vmax.f32 %v635, 0.0
    %v702 = vmax.f32 %v638, 0.0
    %v703 = vmax.f32 %v643, 0.0
    %v704 = vmax.f32 %v646, 0.0
    %v705 = vmax.f32 %v651, 0.0
    %v706 = vmax.f32 %v654, 0.0
    %v707 = vmax.f32 %v659, 0.0
    %v708 = vmax.f32 %v662, 0.0
    %v709 = vmax.f32 %v667, 0.0
    %v710 = vmax.f32 %v670, 0.0
    %v711 = vmax.f32 %v675, 0.0
    %v712 = vmax.f32 %v678, 0.0
    %v713 = vpack.c.bf16 %v682, %v681
    %v714 = vpack.c.bf16 %v684, %v683
    %v715 = vpack.c.bf16 %v686, %v685
    %v716 = vpack.c.bf16 %v688, %v687
    %v717 = vpack.c.bf16 %v690, %v689
    %v718 = vpack.c.bf16 %v692, %v691
    %v719 = vpack.c.bf16 %v694, %v693
    %v720 = vpack.c.bf16 %v696, %v695
    %v721 = vpack.c.bf16 %v698, %v697
    %v722 = vpack.c.bf16 %v700, %v699
    %v723 = vpack.c.bf16 %v702, %v701
    %v724 = vpack.c.bf16 %v704, %v703
    %v725 = vpack.c.bf16 %v706, %v705
    %v726 = vpack.c.bf16 %v708, %v707
    %v727 = vpack.c.bf16 %v710, %v709
    %v728 = vpack.c.bf16 %v712, %v711
    %v729 = vld [vmem:[#allocation2] sm:$0xf]
    %v730 = vld [vmem:[#allocation2 + $0x4] sm:$0xf]
    %v731 = vld [vmem:[#allocation2 + $0x8] sm:$0xf]
    %v732 = vld [vmem:[#allocation2 + $0xc] sm:$0xf]
    %v733 = vld [vmem:[#allocation2 + $0x10] sm:$0xf]
    %v734 = vld [vmem:[#allocation2 + $0x14] sm:$0xf]
    %v735 = vld [vmem:[#allocation2 + $0x18] sm:$0xf]
    %v736 = vld [vmem:[#allocation2 + $0x1c] sm:$0xf]
    %v737 = vld [vmem:[#allocation2 + $0x20] sm:$0xf]
    %v738 = vld [vmem:[#allocation2 + $0x24] sm:$0xf]
    %v739 = vld [vmem:[#allocation2 + $0x28] sm:$0xf]
    %v740 = vld [vmem:[#allocation2 + $0x2c] sm:$0xf]
    %v741 = vld [vmem:[#allocation2 + $0x30] sm:$0xf]
    %v742 = vld [vmem:[#allocation2 + $0x34] sm:$0xf]
    %v743 = vld [vmem:[#allocation2 + $0x38] sm:$0xf]
    %v744 = vld [vmem:[#allocation2 + $0x3c] sm:$0xf]
    %v745 = vld [vmem:[%s6] sm:$0x1]
    %v747 = vlaneseq
    %v748 = vshrl.u32 %v747, 7
    %v749 = vsub.s32 0, %v748
    %v750 = vrot.slane %v745, %v749
    %v768 = vunpack.c.l.b16 %v729
    %v769 = vunpack.c.l.b16 %v730
    %v770 = vunpack.c.l.b16 %v731
    %v771 = vunpack.c.l.b16 %v732
    %v772 = vunpack.c.l.b16 %v733
    %v773 = vunpack.c.l.b16 %v734
    %v774 = vunpack.c.l.b16 %v735
    %v775 = vunpack.c.l.b16 %v736
    %v776 = vunpack.c.l.b16 %v737
    %v777 = vunpack.c.l.b16 %v738
    %v778 = vunpack.c.l.b16 %v739
    %v779 = vunpack.c.l.b16 %v740
    %v780 = vunpack.c.l.b16 %v741
    %v781 = vunpack.c.l.b16 %v742
    %v782 = vunpack.c.l.b16 %v743
    %v783 = vunpack.c.l.b16 %v744
    %v784 = vpack.c.b16 %v769, %v768
    %v785 = vpack.c.b16 %v771, %v770
    %v786 = vpack.c.b16 %v773, %v772
    %v787 = vpack.c.b16 %v775, %v774
    %v788 = vpack.c.b16 %v777, %v776
    %v789 = vpack.c.b16 %v779, %v778
    %v790 = vpack.c.b16 %v781, %v780
    %v791 = vpack.c.b16 %v783, %v782
    %800 = vmatprep.subr.bf16.mxu0 0
    %801 = vmatpush1.bf16.msra.mxu0 %v784
    %802 = vmatprep.subr.bf16.mxu0 0
    %803 = vmatpush1.bf16.msra.mxu0 %v785
    %804 = vmatprep.subr.bf16.mxu0 0
    %805 = vmatpush1.bf16.msra.mxu0 %v786
    %806 = vmatprep.subr.bf16.mxu0 0
    %807 = vmatpush1.bf16.msra.mxu0 %v787
    %808 = vmatprep.subr.bf16.mxu0 0
    %809 = vmatpush1.bf16.msra.mxu0 %v788
    %810 = vmatprep.subr.bf16.mxu0 0
    %811 = vmatpush1.bf16.msra.mxu0 %v789
    %812 = vmatprep.subr.bf16.mxu0 0
    %813 = vmatpush1.bf16.msra.mxu0 %v790
    %814 = vmatprep.subr.bf16.mxu0 0
    %815 = vmatpush1.bf16.msra.mxu0 %v791
    %816 = vmatprep.subr.bf16.mxu0 0
    %817 = vmatpush1.bf16.msra.mxu0 0
    %818 = vmatprep.subr.bf16.mxu0 0
    %819 = vmatpush1.bf16.msra.mxu0 0
    %820 = vmatprep.subr.bf16.mxu0 0
    %821 = vmatpush1.bf16.msra.mxu0 0
    %822 = vmatprep.subr.bf16.mxu0 0
    %823 = vmatpush1.bf16.msra.mxu0 0
    %824 = vmatprep.subr.bf16.mxu0 0
    %825 = vmatpush1.bf16.msra.mxu0 0
    %826 = vmatprep.subr.bf16.mxu0 0
    %827 = vmatpush1.bf16.msra.mxu0 0
    %828 = vmatprep.subr.bf16.mxu0 0
    %829 = vmatpush1.bf16.msra.mxu0 0
    %830 = vmatprep.subr.bf16.mxu0 0
    %831 = vmatpush1.bf16.msra.mxu0 0
    %832 = vmatprep.mubr.bf16.mxu0 0
    %833 = vmatmul.mubr.bf16.gmra.mrb[0].mxu0 %v713
    %v834 = vpop.f32.mrb[0].mxu0
    %v835 = vadd.f32 %v750, %v834
    %v836 = vpop.f32.mrb[0].mxu0
    %v837 = vpop.f32.mrb[0].mxu0
    %v838 = vadd.f32 %v750, %v837
    %v839 = vpop.f32.mrb[0].mxu0
    %840 = vmatprep.mubr.bf16.mxu0 0
    %841 = vmatmul.mubr.bf16.gmra.mrb[0].mxu0 %v714
    %v842 = vpop.f32.mrb[0].mxu0
    %v843 = vadd.f32 %v750, %v842
    %v844 = vpop.f32.mrb[0].mxu0
    %v845 = vpop.f32.mrb[0].mxu0
    %v846 = vadd.f32 %v750, %v845
    %v847 = vpop.f32.mrb[0].mxu0
    %848 = vmatprep.mubr.bf16.mxu0 0
    %849 = vmatmul.mubr.bf16.gmra.mrb[0].mxu0 %v715
    %v850 = vpop.f32.mrb[0].mxu0
    %v851 = vadd.f32 %v750, %v850
    %v852 = vpop.f32.mrb[0].mxu0
    %v853 = vpop.f32.mrb[0].mxu0
    %v854 = vadd.f32 %v750, %v853
    %v855 = vpop.f32.mrb[0].mxu0
    %856 = vmatprep.mubr.bf16.mxu0 0
    %857 = vmatmul.mubr.bf16.gmra.mrb[0].mxu0 %v716
    %v858 = vpop.f32.mrb[0].mxu0
    %v859 = vadd.f32 %v750, %v858
    %v860 = vpop.f32.mrb[0].mxu0
    %v861 = vpop.f32.mrb[0].mxu0
    %v862 = vadd.f32 %v750, %v861
    %v863 = vpop.f32.mrb[0].mxu0
    %864 = vmatprep.mubr.bf16.mxu0 0
    %865 = vmatmul.mubr.bf16.gmra.mrb[0].mxu0 %v717
    %v866 = vpop.f32.mrb[0].mxu0
    %v867 = vadd.f32 %v750, %v866
    %v868 = vpop.f32.mrb[0].mxu0
    %v869 = vpop.f32.mrb[0].mxu0
    %v870 = vadd.f32 %v750, %v869
    %v871 = vpop.f32.mrb[0].mxu0
    %872 = vmatprep.mubr.bf16.mxu0 0
    %873 = vmatmul.mubr.bf16.gmra.mrb[0].mxu0 %v718
    %v874 = vpop.f32.mrb[0].mxu0
    %v875 = vadd.f32 %v750, %v874
    %v876 = vpop.f32.mrb[0].mxu0
    %v877 = vpop.f32.mrb[0].mxu0
    %v878 = vadd.f32 %v750, %v877
    %v879 = vpop.f32.mrb[0].mxu0
    %880 = vmatprep.mubr.bf16.mxu0 0
    %881 = vmatmul.mubr.bf16.gmra.mrb[0].mxu0 %v719
    %v882 = vpop.f32.mrb[0].mxu0
    %v883 = vadd.f32 %v750, %v882
    %v884 = vpop.f32.mrb[0].mxu0
    %v885 = vpop.f32.mrb[0].mxu0
    %v886 = vadd.f32 %v750, %v885
    %v887 = vpop.f32.mrb[0].mxu0
    %888 = vmatprep.mubr.bf16.mxu0 0
    %889 = vmatmul.mubr.bf16.gmra.mrb[0].mxu0 %v720
    %v890 = vpop.f32.mrb[0].mxu0
    %v891 = vadd.f32 %v750, %v890
    %v892 = vpop.f32.mrb[0].mxu0
    %v893 = vpop.f32.mrb[0].mxu0
    %v894 = vadd.f32 %v750, %v893
    %v895 = vpop.f32.mrb[0].mxu0
    %896 = vmatprep.mubr.bf16.mxu0 0
    %897 = vmatmul.mubr.bf16.gmra.mrb[0].mxu0 %v721
    %v898 = vpop.f32.mrb[0].mxu0
    %v899 = vadd.f32 %v750, %v898
    %v900 = vpop.f32.mrb[0].mxu0
    %v901 = vpop.f32.mrb[0].mxu0
    %v902 = vadd.f32 %v750, %v901
    %v903 = vpop.f32.mrb[0].mxu0
    %904 = vmatprep.mubr.bf16.mxu0 0
    %905 = vmatmul.mubr.bf16.gmra.mrb[0].mxu0 %v722
    %v906 = vpop.f32.mrb[0].mxu0
    %v907 = vadd.f32 %v750, %v906
    %v908 = vpop.f32.mrb[0].mxu0
    %v909 = vpop.f32.mrb[0].mxu0
    %v910 = vadd.f32 %v750, %v909
    %v911 = vpop.f32.mrb[0].mxu0
    %912 = vmatprep.mubr.bf16.mxu0 0
    %913 = vmatmul.mubr.bf16.gmra.mrb[0].mxu0 %v723
    %v914 = vpop.f32.mrb[0].mxu0
    %v915 = vadd.f32 %v750, %v914
    %v916 = vpop.f32.mrb[0].mxu0
    %v917 = vpop.f32.mrb[0].mxu0
    %v918 = vadd.f32 %v750, %v917
    %v919 = vpop.f32.mrb[0].mxu0
    %920 = vmatprep.mubr.bf16.mxu0 0
    %921 = vmatmul.mubr.bf16.gmra.mrb[0].mxu0 %v724
    %v922 = vpop.f32.mrb[0].mxu0
    %v923 = vadd.f32 %v750, %v922
    %v924 = vpop.f32.mrb[0].mxu0
    %v925 = vpop.f32.mrb[0].mxu0
    %v926 = vadd.f32 %v750, %v925
    %v927 = vpop.f32.mrb[0].mxu0
    %928 = vmatprep.mubr.bf16.mxu0 0
    %929 = vmatmul.mubr.bf16.gmra.mrb[0].mxu0 %v725
    %v930 = vpop.f32.mrb[0].mxu0
    %v931 = vadd.f32 %v750, %v930
    %v932 = vpop.f32.mrb[0].mxu0
    %v933 = vpop.f32.mrb[0].mxu0
    %v934 = vadd.f32 %v750, %v933
    %v935 = vpop.f32.mrb[0].mxu0
    %936 = vmatprep.mubr.bf16.mxu0 0
    %937 = vmatmul.mubr.bf16.gmra.mrb[0].mxu0 %v726
    %v938 = vpop.f32.mrb[0].mxu0
    %v939 = vadd.f32 %v750, %v938
    %v940 = vpop.f32.mrb[0].mxu0
    %v941 = vpop.f32.mrb[0].mxu0
    %v942 = vadd.f32 %v750, %v941
    %v943 = vpop.f32.mrb[0].mxu0
    %944 = vmatprep.mubr.bf16.mxu0 0
    %945 = vmatmul.mubr.bf16.gmra.mrb[0].mxu0 %v727
    %v946 = vpop.f32.mrb[0].mxu0
    %v947 = vadd.f32 %v750, %v946
    %v948 = vpop.f32.mrb[0].mxu0
    %v949 = vpop.f32.mrb[0].mxu0
    %v950 = vadd.f32 %v750, %v949
    %v951 = vpop.f32.mrb[0].mxu0
    %952 = vmatprep.mubr.bf16.mxu0 0
    %953 = vmatmul.mubr.bf16.gmra.mrb[0].mxu0 %v728
    %v954 = vpop.f32.mrb[0].mxu0
    %v955 = vadd.f32 %v750, %v954
    %v956 = vpop.f32.mrb[0].mxu0
    %v957 = vpop.f32.mrb[0].mxu0
    %v958 = vadd.f32 %v750, %v957
    %v959 = vpop.f32.mrb[0].mxu0
    %960 = vdwg.mxu0
    %v961 = vtanh.pop %v835
    %v962 = vtanh.pop %v838
    %v963 = vtanh.pop %v843
    %v964 = vtanh.pop %v846
    %v965 = vtanh.pop %v851
    %v966 = vtanh.pop %v854
    %v967 = vtanh.pop %v859
    %v968 = vtanh.pop %v862
    %v969 = vtanh.pop %v867
    %v970 = vtanh.pop %v870
    %v971 = vtanh.pop %v875
    %v972 = vtanh.pop %v878
    %v973 = vtanh.pop %v883
    %v974 = vtanh.pop %v886
    %v975 = vtanh.pop %v891
    %v976 = vtanh.pop %v894
    %v977 = vtanh.pop %v899
    %v978 = vtanh.pop %v902
    %v979 = vtanh.pop %v907
    %v980 = vtanh.pop %v910
    %v981 = vtanh.pop %v915
    %v982 = vtanh.pop %v918
    %v983 = vtanh.pop %v923
    %v984 = vtanh.pop %v926
    %v985 = vtanh.pop %v931
    %v986 = vtanh.pop %v934
    %v987 = vtanh.pop %v939
    %v988 = vtanh.pop %v942
    %v989 = vtanh.pop %v947
    %v990 = vtanh.pop %v950
    %v991 = vtanh.pop %v955
    %v992 = vtanh.pop %v958
    %993 = vst [vmem:[%s7] sm:$0xff] %v961
    %994 = vst [vmem:[%s7 + $0x8] sm:$0xff] %v962
    %995 = vst [vmem:[%s7 + $0x10] sm:$0xff] %v963
    %996 = vst [vmem:[%s7 + $0x18] sm:$0xff] %v964
    %997 = vst [vmem:[%s7 + $0x20] sm:$0xff] %v965
    %998 = vst [vmem:[%s7 + $0x28] sm:$0xff] %v966
    %999 = vst [vmem:[%s7 + $0x30] sm:$0xff] %v967
    %1000 = vst [vmem:[%s7 + $0x38] sm:$0xff] %v968
    %1001 = vst [vmem:[%s7 + $0x40] sm:$0xff] %v969
    %1002 = vst [vmem:[%s7 + $0x48] sm:$0xff] %v970
    %1003 = vst [vmem:[%s7 + $0x50] sm:$0xff] %v971
    %1004 = vst [vmem:[%s7 + $0x58] sm:$0xff] %v972
    %1005 = vst [vmem:[%s7 + $0x60] sm:$0xff] %v973
    %1006 = vst [vmem:[%s7 + $0x68] sm:$0xff] %v974
    %1007 = vst [vmem:[%s7 + $0x70] sm:$0xff] %v975
    %1008 = vst [vmem:[%s7 + $0x78] sm:$0xff] %v976
    %1009 = vst [vmem:[%s7 + $0x80] sm:$0xff] %v977
    %1010 = vst [vmem:[%s7 + $0x88] sm:$0xff] %v978
    %1011 = vst [vmem:[%s7 + $0x90] sm:$0xff] %v979
    %1012 = vst [vmem:[%s7 + $0x98] sm:$0xff] %v980
    %1013 = vst [vmem:[%s7 + $0xa0] sm:$0xff] %v981
    %1014 = vst [vmem:[%s7 + $0xa8] sm:$0xff] %v982
    %1015 = vst [vmem:[%s7 + $0xb0] sm:$0xff] %v983
    %1016 = vst [vmem:[%s7 + $0xb8] sm:$0xff] %v984
    %1017 = vst [vmem:[%s7 + $0xc0] sm:$0xff] %v985
    %1018 = vst [vmem:[%s7 + $0xc8] sm:$0xff] %v986
    %1019 = vst [vmem:[%s7 + $0xd0] sm:$0xff] %v987
    %1020 = vst [vmem:[%s7 + $0xd8] sm:$0xff] %v988
    %1021 = vst [vmem:[%s7 + $0xe0] sm:$0xff] %v989
    %1022 = vst [vmem:[%s7 + $0xe8] sm:$0xff] %v990
    %1023 = vst [vmem:[%s7 + $0xf0] sm:$0xff] %v991
    %1024 = vst [vmem:[%s7 + $0xf8] sm:$0xff] %v992
    // Predicated region
    $region34: #{actor_forward.1} parent=1 // pred_check
      _
    $region35: #{actor_forward.1} parent=1 // pred_check_branch
      %1026 = sbr.rel (0) target = $region37
    $region36: #{actor_forward.1} parent=1 // pred_region
      _
    $region37: #{actor_forward.1} parent=1 // pred_fallthru
      _
    // Predicated region
    $region38: #{actor_forward.1} parent=1 // pred_check
      _
    $region39: #{actor_forward.1} parent=1 // pred_check_branch
      %1028 = sbr.rel (0) target = $region41
    $region40: #{actor_forward.1} parent=1 // pred_region
      _
    $region41: #{actor_forward.1} parent=1 // pred_fallthru
      _
    %1029 = vsyncpa [#allocation3], 1

</llo_original>
